<compile_context>
chip_gen: v5e
topology: v5e:2x2
jax: 0.10.0
libtpu: 0.0.40
codegen_flags: <defaults>
</compile_context>

<pallas_src>
import jax
import jax.numpy as jnp
from jax import lax
from jax.experimental import pallas as pl
from jax.experimental.pallas import tpu as pltpu

# ------------------------- model dimensions (small) -------------------------
DIM_STATE = 16
DIM_LATENT = 8
DIM_BELIEF = 4
DIM_TASK = 4
DIM_IN = DIM_STATE + DIM_LATENT + DIM_BELIEF + DIM_TASK  # 32
HIDDEN = [32, 32]
BATCH = 8
TANH_GAIN = 5.0 / 3.0  # nn.init.calculate_gain('tanh')

H = HIDDEN[1]          # 32
FUSED = 2 * H          # 64  (actor half | critic half)

# ------------------- packed parameter slab layout (f32 [128, 64]) -----------
# All section starts are multiples of 8 so in-kernel static slices stay
# sublane-tile aligned (no relayout copies).
ROW_W0 = 0                    # rows [0, 32)   : [aw0 | cw0]            (32 x 64)
ROW_W1 = 32                   # rows [32, 96)  : blockdiag(aw1, cw1)    (64 x 64)
ROW_B0 = 96                   # row 96         : [ab0 | cb0]            (1 x 64)
ROW_B1 = 104                  # row 104        : [ab1 | cb1]            (1 x 64)
ROW_CLW = 112                 # row 112        : [0 (32) | clw^T (32)]  (1 x 64)
ROW_CLB = 120                 # row 120        : clb broadcast          (1 x 64)
SLAB_ROWS = 128


# ------------------------------ Pallas kernel -------------------------------
def policy_fwd_kernel(x_ref, w_ref, out_ref):
    x = x_ref[...]                                   # [B, 32]

    w0 = w_ref[ROW_W0:ROW_W0 + DIM_IN, :]            # [32, 64]
    w1 = w_ref[ROW_W1:ROW_W1 + FUSED, :]             # [64, 64]
    b0 = w_ref[ROW_B0:ROW_B0 + 1, :]                 # [1, 64]
    b1 = w_ref[ROW_B1:ROW_B1 + 1, :]                 # [1, 64]
    clw = w_ref[ROW_CLW:ROW_CLW + 1, :]              # [1, 64] (first 32 lanes = 0)
    clb = w_ref[ROW_CLB:ROW_CLB + 1, 0:1]            # [1, 1]

    # Fused layer 0: [actor_h0 | critic_h0] in one MXU op + one tanh.
    h0 = jnp.tanh(jnp.dot(x, w0, preferred_element_type=jnp.float32) + b0)   # [B, 64]
    # Fused layer 1 (block-diagonal): [actor_h1 | critic_h1] in one MXU op.
    h1 = jnp.tanh(jnp.dot(h0, w1, preferred_element_type=jnp.float32) + b1)  # [B, 64]

    # critic_linear head on VPU + lane reduction (clw is zero over the actor half).
    value = jnp.sum(h1 * clw, axis=-1, keepdims=True) + clb                  # [B, 1]

    # Single lane-dense store: lanes [0,32) = hidden_actor, lanes [32,64) = value.
    lane = lax.broadcasted_iota(jnp.int32, h1.shape, 1)
    out_ref[...] = jnp.where(lane < H, h1, value)


def policy_forward(x, param_slab):
    """x: [B, DIM_IN] f32; param_slab: [128, 64] f32 packed weights.

    Returns (value [B, 1], hidden_actor [B, H])."""
    B = x.shape[0]
    vmem = pl.BlockSpec(memory_space=pltpu.MemorySpace.VMEM)
    out = pl.pallas_call(
        policy_fwd_kernel,
        out_shape=jax.ShapeDtypeStruct((B, FUSED), jnp.float32),
        in_specs=[vmem, vmem],
        out_specs=vmem,
    )(x, param_slab)
    hidden_actor = out[:, :H]
    value = out[:, H:H + 1]
    return value, hidden_actor


# ------------------------- deterministic init (normc) -----------------------
def init_normc(key, n_in, n_out, gain):
    # torch Linear weight is (out, in); init_normc_ normalises over dim=1 (the input dim).
    w = jax.random.normal(key, (n_out, n_in), dtype=jnp.float32)
    w = w * gain / jnp.sqrt(jnp.sum(w * w, axis=1, keepdims=True))
    return w.T  # store as (in, out) for x @ W in the kernel


def build_params(key):
    keys = jax.random.split(key, 6)
    params = {}
    # actor layers
    params["aw0"] = init_normc(keys[0], DIM_IN, HIDDEN[0], TANH_GAIN)
    params["ab0"] = jnp.zeros((1, HIDDEN[0]), jnp.float32)
    params["aw1"] = init_normc(keys[1], HIDDEN[0], HIDDEN[1], TANH_GAIN)
    params["ab1"] = jnp.zeros((1, HIDDEN[1]), jnp.float32)
    # critic layers
    params["cw0"] = init_normc(keys[2], DIM_IN, HIDDEN[0], TANH_GAIN)
    params["cb0"] = jnp.zeros((1, HIDDEN[0]), jnp.float32)
    params["cw1"] = init_normc(keys[3], HIDDEN[0], HIDDEN[1], TANH_GAIN)
    params["cb1"] = jnp.zeros((1, HIDDEN[1]), jnp.float32)
    # critic_linear: PyTorch default uniform(-1/sqrt(in), 1/sqrt(in)), deterministic here
    bound = 1.0 / jnp.sqrt(float(HIDDEN[-1]))
    params["clw"] = jax.random.uniform(keys[4], (HIDDEN[-1], 1), jnp.float32, -bound, bound)
    params["clb"] = jax.random.uniform(keys[5], (1, 1), jnp.float32, -bound, bound)
    return params


def pack_params(p):
    """Pack all Policy weights into one f32 [128, 64] slab (done once, outside kernel)."""
    # Layer 0 fused: [aw0 | cw0] and [ab0 | cb0]
    w0 = jnp.concatenate([p["aw0"], p["cw0"]], axis=1)                 # [32, 64]
    b0 = jnp.concatenate([p["ab0"], p["cb0"]], axis=1)                 # [1, 64]
    # Layer 1 fused as block-diagonal
    z = jnp.zeros((HIDDEN[0], HIDDEN[1]), jnp.float32)
    w1 = jnp.concatenate(
        [jnp.concatenate([p["aw1"], z], axis=1),
         jnp.concatenate([z, p["cw1"]], axis=1)], axis=0)              # [64, 64]
    b1 = jnp.concatenate([p["ab1"], p["cb1"]], axis=1)                 # [1, 64]
    # critic_linear as a lane row: zeros over actor half, clw^T over critic half
    clw_row = jnp.concatenate(
        [jnp.zeros((1, HIDDEN[1]), jnp.float32), p["clw"].T], axis=1)  # [1, 64]
    clb_row = jnp.broadcast_to(p["clb"], (1, FUSED))                   # [1, 64]

    slab = jnp.zeros((SLAB_ROWS, FUSED), jnp.float32)
    slab = slab.at[ROW_W0:ROW_W0 + DIM_IN, :].set(w0)
    slab = slab.at[ROW_W1:ROW_W1 + FUSED, :].set(w1)
    slab = slab.at[ROW_B0:ROW_B0 + 1, :].set(b0)
    slab = slab.at[ROW_B1:ROW_B1 + 1, :].set(b1)
    slab = slab.at[ROW_CLW:ROW_CLW + 1, :].set(clw_row)
    slab = slab.at[ROW_CLB:ROW_CLB + 1, :].set(clb_row)
    return slab


def reference_forward(x, p):
    """Pure-JAX reference of Policy.forward (for a sanity check)."""
    ha = jnp.tanh(x @ p["aw0"] + p["ab0"])
    ha = jnp.tanh(ha @ p["aw1"] + p["ab1"])
    hc = jnp.tanh(x @ p["cw0"] + p["cb0"])
    hc = jnp.tanh(hc @ p["cw1"] + p["cb1"])
    return hc @ p["clw"] + p["clb"], ha


if __name__ == "__main__":
    root = jax.random.PRNGKey(0)
    k_state, k_latent, k_belief, k_task, k_params = jax.random.split(root, 5)

    state = jax.random.normal(k_state, (BATCH, DIM_STATE), jnp.float32)
    latent = jax.random.normal(k_latent, (BATCH, DIM_LATENT), jnp.float32)
    belief = jax.random.normal(k_belief, (BATCH, DIM_BELIEF), jnp.float32)
    task = jax.random.normal(k_task, (BATCH, DIM_TASK), jnp.float32)

    params = build_params(k_params)
    param_slab = pack_params(params)      # packed once; re-used across calls

    # Glue: concat of the (non-normalised, non-encoded) inputs, as in Policy.forward.
    x = jnp.concatenate([state, latent, belief, task], axis=-1)

    value, hidden_actor = policy_forward(x, param_slab)
    jax.block_until_ready((value, hidden_actor))

    ref_value, ref_actor = reference_forward(x, params)
    assert value.shape == (BATCH, 1) and hidden_actor.shape == (BATCH, HIDDEN[-1])
    assert jnp.allclose(value, ref_value, atol=1e-5, rtol=1e-5)
    assert jnp.allclose(hidden_actor, ref_actor, atol=1e-5, rtol=1e-5)

    # TODO(synk): the action-distribution heads (Categorical / DiagGaussian in
    # act()/evaluate_actions) involve sampling and are outside forward(); not ported.

    print("KERNEL_OK")
</pallas_src>

<mosaic_0001>
module attributes {stable_mosaic.version = 11 : i64} {
  func.func @policy_fwd_kernel(%arg0: memref<8x32xf32, #tpu.memory_space<vmem>>, %arg1: memref<128x64xf32, #tpu.memory_space<vmem>>, %arg2: memref<8x64xf32, #tpu.memory_space<vmem>>) attributes {dimension_semantics = [], scalar_prefetch = 0 : i64, scratch_operands = 0 : i64, tpu.core_type = #tpu.core_type<tc>} {
    %c0 = arith.constant 0 : index
    %c0_0 = arith.constant 0 : index
    %0 = vector.load %arg0[%c0, %c0_0] : memref<8x32xf32, #tpu.memory_space<vmem>>, vector<8x32xf32>
    %c0_1 = arith.constant 0 : index
    %c0_2 = arith.constant 0 : index
    %1 = vector.load %arg1[%c0_1, %c0_2] : memref<128x64xf32, #tpu.memory_space<vmem>>, vector<32x64xf32>
    %c32 = arith.constant 32 : index
    %c0_3 = arith.constant 0 : index
    %2 = vector.load %arg1[%c32, %c0_3] : memref<128x64xf32, #tpu.memory_space<vmem>>, vector<64x64xf32>
    %c96 = arith.constant 96 : index
    %c0_4 = arith.constant 0 : index
    %3 = vector.load %arg1[%c96, %c0_4] : memref<128x64xf32, #tpu.memory_space<vmem>>, vector<1x64xf32>
    %c104 = arith.constant 104 : index
    %c0_5 = arith.constant 0 : index
    %4 = vector.load %arg1[%c104, %c0_5] : memref<128x64xf32, #tpu.memory_space<vmem>>, vector<1x64xf32>
    %c112 = arith.constant 112 : index
    %c0_6 = arith.constant 0 : index
    %5 = vector.load %arg1[%c112, %c0_6] : memref<128x64xf32, #tpu.memory_space<vmem>>, vector<1x64xf32>
    %c120 = arith.constant 120 : index
    %c0_7 = arith.constant 0 : index
    %6 = vector.load %arg1[%c120, %c0_7] : memref<128x64xf32, #tpu.memory_space<vmem>>, vector<1x1xf32>
    %cst = arith.constant dense<0.000000e+00> : vector<8x64xf32>
    %7 = tpu.matmul %0, %1, %cst {dimension_numbers = #tpu.dot_dimension_numbers<[1], [0], [0], [1], [0, 0, 1, 1], [], []>} : vector<8x32xf32>, vector<32x64xf32>, vector<8x64xf32> -> vector<8x64xf32>
    %8 = vector.broadcast %3 : vector<1x64xf32> to vector<8x64xf32>
    %9 = arith.addf %7, %8 : vector<8x64xf32>
    %10 = math.tanh %9 : vector<8x64xf32>
    %cst_8 = arith.constant dense<0.000000e+00> : vector<8x64xf32>
    %11 = tpu.matmul %10, %2, %cst_8 {dimension_numbers = #tpu.dot_dimension_numbers<[1], [0], [0], [1], [0, 0, 1, 1], [], []>} : vector<8x64xf32>, vector<64x64xf32>, vector<8x64xf32> -> vector<8x64xf32>
    %12 = vector.broadcast %4 : vector<1x64xf32> to vector<8x64xf32>
    %13 = arith.addf %11, %12 : vector<8x64xf32>
    %14 = math.tanh %13 : vector<8x64xf32>
    %15 = vector.broadcast %5 : vector<1x64xf32> to vector<8x64xf32>
    %16 = arith.mulf %14, %15 : vector<8x64xf32>
    %cst_9 = arith.constant dense<0.000000e+00> : vector<8xf32>
    %17 = vector.multi_reduction <add>, %16, %cst_9 [1] : vector<8x64xf32> to vector<8xf32>
    %18 = vector.shape_cast %17 : vector<8xf32> to vector<8x1xf32>
    %19 = vector.broadcast %6 : vector<1x1xf32> to vector<8x1xf32>
    %20 = arith.addf %18, %19 : vector<8x1xf32>
    %21 = tpu.iota {dimensions = array<i32: 1>} : vector<8x64xi32>
    %c32_i32 = arith.constant 32 : i32
    %22 = vector.broadcast %c32_i32 : i32 to vector<8x64xi32>
    %23 = arith.cmpi slt, %21, %22 : vector<8x64xi32>
    %24 = vector.shape_cast %20 : vector<8x1xf32> to vector<8x1xf32>
    %25 = vector.broadcast %24 : vector<8x1xf32> to vector<8x64xf32>
    %26 = arith.select %23, %14, %25 : vector<8x64xi1>, vector<8x64xf32>
    %c0_10 = arith.constant 0 : index
    %c0_11 = arith.constant 0 : index
    %27 = vector.load %arg2[%c0_10, %c0_11] : memref<8x64xf32, #tpu.memory_space<vmem>>, vector<8x64xf32>
    tpu.vector_store %arg2[%c0_10, %c0_11], %26 {strides = array<i32>} : memref<8x64xf32, #tpu.memory_space<vmem>>, vector<8x64xf32>,
    return
  }
}

</mosaic_0001>

<llo_original>
// kernel: tpu_custom_call.1
$region0: #{tpu_custom_call.1}
  #allocation0 [shape = 'u32[]', space=smem, size = 0x4, offset = 0x4, fixed_abs, tag = 'smem constant byte address 0x4 - core index']
  #allocation1 [shape = 'u32[72,128]{1,0:T(1,128)}', space=vmem, size = 0x9000, scoped, tag = 'internal scratch']
  %s0 = inlined_call_operand.vmem [shape: f32[8,32], index: 0, kind: input, shape index: {}]
  %s1 = inlined_call_operand.vmem [shape: f32[128,64], index: 1, kind: input, shape index: {}]
  %s2 = inlined_call_operand.hbm [shape: f32[8,64], index: 2, kind: output, shape index: {}]
  %s3 = sld [smem:[#allocation0]]
  $region18: #{tpu_custom_call.1} parent=0
    _
  %s5 = ssub.s32 1, %s3
  %s6 = scalar_select 0, %s5, %s3
  $region1: #{tpu_custom_call.1} parent=0
    #allocation2 [shape = 'u8[4096]{0}', space=vmem, size = 0x1000, scoped, tag = 'output window, operand 0, single buffered']
    #allocation3 [shape = 's32[1]{0}', space=sflag, size = 0x4, scoped, tag = 'scoped memory for tpu_custom_call.1']
    %7 = vsyncpa [#allocation3], 0
    // Predicated region
    $region2: #{tpu_custom_call.1} parent=1 // pred_check
      _
    $region3: #{tpu_custom_call.1} parent=1 // pred_check_branch
      %9 = sbr.rel (0) target = $region5
    $region4: #{tpu_custom_call.1} parent=1 // pred_region
      _
    $region5: #{tpu_custom_call.1} parent=1 // pred_fallthru
      _
    // Predicated region
    $region6: #{tpu_custom_call.1} parent=1 // pred_check
      _
    $region7: #{tpu_custom_call.1} parent=1 // pred_check_branch
      %11 = sbr.rel (0) target = $region9
    $region8: #{tpu_custom_call.1} parent=1 // pred_region
      _
    $region9: #{tpu_custom_call.1} parent=1 // pred_fallthru
      _
    %v12 = vld [vmem:[%s0] sm:$0xff]
    %v13 = vld [vmem:[%s1] sm:$0xff]
    %v14 = vld [vmem:[%s1 + $0x8] sm:$0xff]
    %v15 = vld [vmem:[%s1 + $0x10] sm:$0xff]
    %v16 = vld [vmem:[%s1 + $0x18] sm:$0xff]
    %v17 = vld [vmem:[%s1 + $0x20] sm:$0xff]
    %v18 = vld [vmem:[%s1 + $0x28] sm:$0xff]
    %v19 = vld [vmem:[%s1 + $0x30] sm:$0xff]
    %v20 = vld [vmem:[%s1 + $0x38] sm:$0xff]
    %v21 = vld [vmem:[%s1 + $0x40] sm:$0xff]
    %v22 = vld [vmem:[%s1 + $0x48] sm:$0xff]
    %v23 = vld [vmem:[%s1 + $0x50] sm:$0xff]
    %v24 = vld [vmem:[%s1 + $0x58] sm:$0xff]
    %v25 = vld [vmem:[%s1 + $0x60] sm:$0x1]
    %v26 = vld [vmem:[%s1 + $0x68] sm:$0x1]
    %v27 = vld [vmem:[%s1 + $0x70] sm:$0x1]
    %v28 = vld [vmem:[%s1 + $0x78] sm:$0x1]
    %v29 = vperm.slane %v25, 0
    %vm30 = vcmask 261120
    %v32 = vsel %vm30, %v12, 0
    %34 = vmatpush.msra.mxu0 0.0
    %35 = vmatpush.msra.mxu0 0.0
    %36 = vmatpush.msra.mxu0 0.0
    %37 = vmatpush.msra.mxu0 0.0
    %38 = vmatpush.msra.mxu0 0.0
    %39 = vmatpush.msra.mxu0 0.0
    %40 = vmatpush.msra.mxu0 0.0
    %41 = vmatpush.msra.mxu0 0.0
    %42 = vmatpush.msra.mxu0 0.0
    %43 = vmatpush.msra.mxu0 0.0
    %44 = vmatpush.msra.mxu0 0.0
    %45 = vmatpush.msra.mxu0 0.0
    %46 = vmatpush.msra.mxu0 %v16
    %47 = vmatpush.msra.mxu0 %v15
    %48 = vmatpush.msra.mxu0 %v14
    %49 = vmatpush.msra.mxu0 %v13
    %50 = vmatmul.f32.gmra.mxu0 %v32
    %v51 = vpop.f32.mrf.mxu0
    %v52 = vadd.f32 %v29, %v51
    %53 = vdwg.mxu0
    %v54 = vtanh.pop %v52
    %v55 = vperm.slane %v26, 0
    %vm56 = vcmask 523264
    %v58 = vsel %vm56, %v54, 0
    %60 = vmatpush.msra.mxu0 0.0
    %61 = vmatpush.msra.mxu0 0.0
    %62 = vmatpush.msra.mxu0 0.0
    %63 = vmatpush.msra.mxu0 0.0
    %64 = vmatpush.msra.mxu0 0.0
    %65 = vmatpush.msra.mxu0 0.0
    %66 = vmatpush.msra.mxu0 0.0
    %67 = vmatpush.msra.mxu0 0.0
    %68 = vmatpush.msra.mxu0 %v24
    %69 = vmatpush.msra.mxu0 %v23
    %70 = vmatpush.msra.mxu0 %v22
    %71 = vmatpush.msra.mxu0 %v21
    %72 = vmatpush.msra.mxu0 %v20
    %73 = vmatpush.msra.mxu0 %v19
    %74 = vmatpush.msra.mxu0 %v18
    %75 = vmatpush.msra.mxu0 %v17
    %76 = vmatmul.f32.gmra.mxu0 %v58
    %v77 = vpop.f32.mrf.mxu0
    %v78 = vadd.f32 %v55, %v77
    %79 = vdwg.mxu0
    %v80 = vtanh.pop %v78
    %v81 = vperm.slane %v27, 0
    %v82 = vmul.f32 %v80, %v81
    %v83 = vsel %vm56, %v82, 0.0
    %84 = vadd.xlane.f32.xlu0 %v83
    %v85 = vpop.xlane.xlu0 %84
    %v86 = vperm.slane %v28, 0
    %v87 = vadd.f32 %v85, %v86
    %v88 = vlaneseq
    %v89 = vand.u32 %v88, 127
    %vm90 = vcmp.lt.s32.totalorder %v89, 32
    %92 = vset.pattern.permute.xlu0 0
    %93 = vperm.xlu0 %92, %v87
    %v94 = vpop.permute.xlu0 %93
    %v96 = vsel %vm90, %v80, %v94
    %97 = vst.msk [vmem:[#allocation2] sm:$0xff] %vm56, %v96
    // Predicated region
    $region10: #{tpu_custom_call.1} parent=1 // pred_check
      _
    $region11: #{tpu_custom_call.1} parent=1 // pred_check_branch
      %99 = sbr.rel (0) target = $region13
    $region12: #{tpu_custom_call.1} parent=1 // pred_region
      %101 = vsyncadd [#allocation3], 0
      %s103 = sshll.u32 [#allocation2], 4
      %s104 = int_to_ptr.vmem [resolvable:$true] %s103
      %s105 = sshll.u32 %s2, 4
      %s106 = int_to_ptr.hbm [resolvable:$true] %s105
      %108 = dma.vmem_to_hbm [thread:$0]  %s104, 128, %s106, [#allocation3]
    $region13: #{tpu_custom_call.1} parent=1 // pred_fallthru
      _
    // Predicated region
    $region14: #{tpu_custom_call.1} parent=1 // pred_check
      _
    $region15: #{tpu_custom_call.1} parent=1 // pred_check_branch
      %110 = sbr.rel (0) target = $region17
    $region16: #{tpu_custom_call.1} parent=1 // pred_region
      %112 = dma.done [#allocation3], 128
    $region17: #{tpu_custom_call.1} parent=1 // pred_fallthru
      _
    %113 = vsyncpa [#allocation3], 1

</llo_original>
